<compile_context>
chip_gen: v5e
topology: v5e:2x2
jax: 0.10.0
libtpu: 0.0.40
codegen_flags: <defaults>
</compile_context>

<pallas_src>
import jax
import jax.numpy as jnp
from jax.experimental import pallas as pl
from jax.experimental.pallas import tpu as pltpu

SUBLANE = 8  # f32 sublane granularity for the second-to-last block dim


def _round_up(n, m):
    return ((n + m - 1) // m) * m


def classifier_kernel(x_ref, w1_ref, b1_ref, w2_ref, b2_ref, o_ref):
    """Fused fc1 -> (dropout: identity in eval) -> tanh -> fc2 for one batch tile."""
    x = x_ref[...]                                                    # [TM, D_in] bf16
    h = jnp.dot(x, w1_ref[...], preferred_element_type=jnp.float32)  # [TM, H] f32 (MXU)
    h = h + b1_ref[...]                                               # f32 bias broadcast
    # dropout (eval mode) == identity
    h = jnp.tanh(h)                                                   # f32 (EUP)
    y = jnp.dot(h.astype(jnp.bfloat16), w2_ref[...],
                preferred_element_type=jnp.float32)                   # [TM, D_out] f32 (MXU)
    y = y + b2_ref[...]
    o_ref[...] = y.astype(o_ref.dtype)


def _vmem_capacity_bytes():
    try:
        info = pltpu.get_tpu_info()
        cap = getattr(info, "vmem_capacity_bytes", None)
        if cap:
            return int(cap)
    except Exception:
        pass
    return 64 << 20  # conservative fallback (v7x-sized VMEM)


def prepare_params(w1, b1, w2, b2):
    """One-time parameter prep (kept outside the per-call path).

    Weights are stored [in, out] (PyTorch stores [out, in]; transpose when
    importing real torch weights) and cast to bf16 for native MXU rate.
    Biases stay f32, reshaped to (1, N) for broadcast.
    """
    H = w1.shape[1]
    D_out = w2.shape[1]
    return (w1.astype(jnp.bfloat16),
            b1.astype(jnp.float32).reshape(1, H),
            w2.astype(jnp.bfloat16),
            b2.astype(jnp.float32).reshape(1, D_out))


def _call(xp, w1, b1, w2, b2, *, TM, vmem_limit, cost, weight_mode):
    B_p, D_in = xp.shape
    H = w1.shape[1]
    D_out = w2.shape[1]
    wk = {} if weight_mode is None else {"pipeline_mode": weight_mode}
    return pl.pallas_call(
        classifier_kernel,
        out_shape=jax.ShapeDtypeStruct((B_p, D_out), jnp.float32),
        grid=(B_p // TM,),
        in_specs=[
            pl.BlockSpec((TM, D_in), lambda i: (i, 0)),          # x: tiled over batch
            pl.BlockSpec((D_in, H), lambda i: (0, 0), **wk),     # w1: VMEM-resident
            pl.BlockSpec((1, H), lambda i: (0, 0), **wk),        # b1: VMEM-resident
            pl.BlockSpec((H, D_out), lambda i: (0, 0), **wk),    # w2: VMEM-resident
            pl.BlockSpec((1, D_out), lambda i: (0, 0), **wk),    # b2: VMEM-resident
        ],
        out_specs=pl.BlockSpec((TM, D_out), lambda i: (i, 0)),
        compiler_params=pltpu.CompilerParams(
            dimension_semantics=("parallel",),   # shard batch tiles across TCs (v7x)
            vmem_limit_bytes=vmem_limit,
        ),
        cost_estimate=cost,
    )(xp, w1, b1, w2, b2)


def classifier_forward(x, params, *, tm_max=512):
    """Forward pass: tanh(x @ w1 + b1) @ w2 + b2 (dropout = identity, eval mode).

    x: [B, D_in] (any float dtype; cast to bf16 for the MXU)
    params: output of prepare_params
    returns [B, D_out] float32
    """
    w1, b1, w2, b2 = params
    B, D_in = x.shape
    H = w1.shape[1]
    D_out = w2.shape[1]

    # Balanced batch tiles; force >= 2 (and even) grid steps so both v7x
    # TensorCores get work and DMAs overlap across iterations.
    num_tiles = max(2, pl.cdiv(B, tm_max))
    if num_tiles % 2:
        num_tiles += 1
    TM = _round_up(pl.cdiv(B, num_tiles), SUBLANE)
    B_p = num_tiles * TM

    # Only batch padding (no feature-axis pad/rewrite of the dominant operand).
    xb = x.astype(jnp.bfloat16)
    if B_p != B:
        xb = jnp.pad(xb, ((0, B_p - B), (0, 0)))

    # Honest VMEM accounting for the requested buffer counts.
    def _need(wbufs):
        return (2 * TM * D_in * 2                         # x tiles (bf16, double-buffered)
                + 2 * TM * D_out * 4                      # out tiles (f32, double-buffered)
                + wbufs * (D_in * H + H * D_out) * 2      # weights (bf16)
                + wbufs * (H + D_out) * 4                 # biases (f32)
                + 2 * TM * H * 4)                         # f32 intermediate + headroom

    cap = int(0.75 * _vmem_capacity_bytes())  # ~96 MiB on v5e/v6e, ~48 MiB on v7x
    cost = pl.CostEstimate(
        flops=2 * B * (D_in * H + H * D_out),
        transcendentals=B * H,
        bytes_accessed=(B * D_in * 2 + (D_in * H + H * D_out) * 2
                        + (H + D_out) * 4 + B * D_out * 4),
    )

    buffered = getattr(pl, "Buffered", None)
    if buffered is not None:
        try:
            vmem_limit = int(min(max(3 * _need(1) // 2, 16 << 20), cap))
            out_p = _call(xb, w1, b1, w2, b2, TM=TM, vmem_limit=vmem_limit,
                          cost=cost, weight_mode=buffered(1))
            out_p = jax.block_until_ready(out_p)
            return out_p[:B, :]
        except Exception:
            pass  # fall back to default (double-buffered) weight pipelining

    vmem_limit = int(min(max(3 * _need(2) // 2, 16 << 20), cap))
    out_p = _call(xb, w1, b1, w2, b2, TM=TM, vmem_limit=vmem_limit,
                  cost=cost, weight_mode=None)
    return out_p[:B, :]


def init_params(key, input_dim, hidden_dim, output_dim):
    """Deterministic init mimicking nn.Linear (uniform +/- 1/sqrt(fan_in)).

    Weights are created as [in, out] so the kernel computes x @ W directly.
    """
    k1, k2, k3, k4 = jax.random.split(key, 4)
    lim1 = 1.0 / (input_dim ** 0.5)
    lim2 = 1.0 / (hidden_dim ** 0.5)
    w1 = jax.random.uniform(k1, (input_dim, hidden_dim), jnp.float32, -lim1, lim1)
    b1 = jax.random.uniform(k2, (hidden_dim,), jnp.float32, -lim1, lim1)
    w2 = jax.random.uniform(k3, (hidden_dim, output_dim), jnp.float32, -lim2, lim2)
    b2 = jax.random.uniform(k4, (output_dim,), jnp.float32, -lim2, lim2)
    return w1, b1, w2, b2


if __name__ == "__main__":
    key = jax.random.PRNGKey(0)
    batch, input_dim, hidden_dim, output_dim = 8, 32, 64, 16
    dropout_prob = 0.1  # unused in eval mode (identity)

    kx, kp = jax.random.split(key)
    x = jax.random.normal(kx, (batch, input_dim), jnp.float32)
    w1, b1, w2, b2 = init_params(kp, input_dim, hidden_dim, output_dim)
    params = prepare_params(w1, b1, w2, b2)

    out = classifier_forward(x, params)
    out = jax.block_until_ready(out)

    # bf16-faithful reference in plain JAX (eval-mode dropout == identity).
    f32 = jnp.float32
    xb = x.astype(jnp.bfloat16).astype(f32)
    w1b = params[0].astype(f32)
    w2b = params[2].astype(f32)
    ref_h = jnp.tanh(xb @ w1b + b1[None, :])
    ref = ref_h.astype(jnp.bfloat16).astype(f32) @ w2b + b2[None, :]

    assert out.shape == (batch, output_dim)
    assert jnp.allclose(out, ref, atol=1e-2, rtol=1e-2)

    print("KERNEL_OK")
</pallas_src>

<mosaic_0001>
module attributes {stable_mosaic.version = 11 : i64} {
  func.func @classifier_kernel(%arg0: i32, %arg1: memref<8x32xbf16, #tpu.memory_space<vmem>>, %arg2: memref<32x64xbf16, #tpu.memory_space<vmem>>, %arg3: memref<1x64xf32, #tpu.memory_space<vmem>>, %arg4: memref<64x16xbf16, #tpu.memory_space<vmem>>, %arg5: memref<1x16xf32, #tpu.memory_space<vmem>>, %arg6: memref<8x16xf32, #tpu.memory_space<vmem>>) attributes {dimension_semantics = [#tpu.dimension_semantics<parallel>], iteration_bounds = array<i64: 2>, scalar_prefetch = 0 : i64, scratch_operands = 0 : i64, tpu.core_type = #tpu.core_type<tc>, window_params = [{transform_indices = @transform_0, window_bounds = array<i64: 8, 32>}, {pipeline_mode = #tpu.pipeline_mode<synchronous>, transform_indices = @transform_1, window_bounds = array<i64: 32, 64>}, {pipeline_mode = #tpu.pipeline_mode<synchronous>, transform_indices = @transform_2, window_bounds = array<i64: 1, 64>}, {pipeline_mode = #tpu.pipeline_mode<synchronous>, transform_indices = @transform_3, window_bounds = array<i64: 64, 16>}, {pipeline_mode = #tpu.pipeline_mode<synchronous>, transform_indices = @transform_4, window_bounds = array<i64: 1, 16>}, {transform_indices = @transform_5, window_bounds = array<i64: 8, 16>}]} {
    %c0 = arith.constant 0 : index
    %c0_0 = arith.constant 0 : index
    %0 = vector.load %arg1[%c0, %c0_0] : memref<8x32xbf16, #tpu.memory_space<vmem>>, vector<8x32xbf16>
    %c0_1 = arith.constant 0 : index
    %c0_2 = arith.constant 0 : index
    %1 = vector.load %arg2[%c0_1, %c0_2] : memref<32x64xbf16, #tpu.memory_space<vmem>>, vector<32x64xbf16>
    %cst = arith.constant dense<0.000000e+00> : vector<8x64xf32>
    %2 = tpu.matmul %0, %1, %cst {dimension_numbers = #tpu.dot_dimension_numbers<[1], [0], [0], [1], [0, 0, 1, 1], [], []>} : vector<8x32xbf16>, vector<32x64xbf16>, vector<8x64xf32> -> vector<8x64xf32>
    %c0_3 = arith.constant 0 : index
    %c0_4 = arith.constant 0 : index
    %3 = vector.load %arg3[%c0_3, %c0_4] : memref<1x64xf32, #tpu.memory_space<vmem>>, vector<1x64xf32>
    %4 = vector.broadcast %3 : vector<1x64xf32> to vector<8x64xf32>
    %5 = arith.addf %2, %4 : vector<8x64xf32>
    %6 = math.tanh %5 : vector<8x64xf32>
    %7 = arith.truncf %6 : vector<8x64xf32> to vector<8x64xbf16>
    %c0_5 = arith.constant 0 : index
    %c0_6 = arith.constant 0 : index
    %8 = vector.load %arg4[%c0_5, %c0_6] : memref<64x16xbf16, #tpu.memory_space<vmem>>, vector<64x16xbf16>
    %cst_7 = arith.constant dense<0.000000e+00> : vector<8x16xf32>
    %9 = tpu.matmul %7, %8, %cst_7 {dimension_numbers = #tpu.dot_dimension_numbers<[1], [0], [0], [1], [0, 0, 1, 1], [], []>} : vector<8x64xbf16>, vector<64x16xbf16>, vector<8x16xf32> -> vector<8x16xf32>
    %c0_8 = arith.constant 0 : index
    %c0_9 = arith.constant 0 : index
    %10 = vector.load %arg5[%c0_8, %c0_9] : memref<1x16xf32, #tpu.memory_space<vmem>>, vector<1x16xf32>
    %11 = vector.broadcast %10 : vector<1x16xf32> to vector<8x16xf32>
    %12 = arith.addf %9, %11 : vector<8x16xf32>
    %c0_10 = arith.constant 0 : index
    %c0_11 = arith.constant 0 : index
    %13 = vector.load %arg6[%c0_10, %c0_11] : memref<8x16xf32, #tpu.memory_space<vmem>>, vector<8x16xf32>
    tpu.vector_store %arg6[%c0_10, %c0_11], %12 {strides = array<i32>} : memref<8x16xf32, #tpu.memory_space<vmem>>, vector<8x16xf32>,
    return
  }
  func.func @transform_0(%arg0: i32) -> (i32, i32) {
    %c0_i32 = arith.constant 0 : i32
    %c0_i32_0 = arith.constant 0 : i32
    return %arg0, %c0_i32 : i32, i32
  }
  func.func @transform_1(%arg0: i32) -> (i32, i32) {
    %c0_i32 = arith.constant 0 : i32
    %c0_i32_0 = arith.constant 0 : i32
    %c0_i32_1 = arith.constant 0 : i32
    return %c0_i32, %c0_i32_0 : i32, i32
  }
  func.func @transform_2(%arg0: i32) -> (i32, i32) {
    %c0_i32 = arith.constant 0 : i32
    %c0_i32_0 = arith.constant 0 : i32
    %c0_i32_1 = arith.constant 0 : i32
    return %c0_i32, %c0_i32_0 : i32, i32
  }
  func.func @transform_3(%arg0: i32) -> (i32, i32) {
    %c0_i32 = arith.constant 0 : i32
    %c0_i32_0 = arith.constant 0 : i32
    %c0_i32_1 = arith.constant 0 : i32
    return %c0_i32, %c0_i32_0 : i32, i32
  }
  func.func @transform_4(%arg0: i32) -> (i32, i32) {
    %c0_i32 = arith.constant 0 : i32
    %c0_i32_0 = arith.constant 0 : i32
    %c0_i32_1 = arith.constant 0 : i32
    return %c0_i32, %c0_i32_0 : i32, i32
  }
  func.func @transform_5(%arg0: i32) -> (i32, i32) {
    %c0_i32 = arith.constant 0 : i32
    %c0_i32_0 = arith.constant 0 : i32
    return %arg0, %c0_i32 : i32, i32
  }
}

module attributes {stable_mosaic.version = 11 : i64} {
  func.func @classifier_kernel(%arg0: i32, %arg1: memref<8x32xbf16, #tpu.memory_space<vmem>>, %arg2: memref<32x64xbf16, #tpu.memory_space<vmem>>, %arg3: memref<1x64xf32, #tpu.memory_space<vmem>>, %arg4: memref<64x16xbf16, #tpu.memory_space<vmem>>, %arg5: memref<1x16xf32, #tpu.memory_space<vmem>>, %arg6: memref<8x16xf32, #tpu.memory_space<vmem>>) attributes {dimension_semantics = [#tpu.dimension_semantics<parallel>], iteration_bounds = array<i64: 2>, scalar_prefetch = 0 : i64, scratch_operands = 0 : i64, tpu.core_type = #tpu.core_type<tc>, window_params = [{transform_indices = @transform_0, window_bounds = array<i64: 8, 32>}, {pipeline_mode = #tpu.pipeline_mode<synchronous>, transform_indices = @transform_1, window_bounds = array<i64: 32, 64>}, {pipeline_mode = #tpu.pipeline_mode<synchronous>, transform_indices = @transform_2, window_bounds = array<i64: 1, 64>}, {pipeline_mode = #tpu.pipeline_mode<synchronous>, transform_indices = @transform_3, window_bounds = array<i64: 64, 16>}, {pipeline_mode = #tpu.pipeline_mode<synchronous>, transform_indices = @transform_4, window_bounds = array<i64: 1, 16>}, {transform_indices = @transform_5, window_bounds = array<i64: 8, 16>}]} {
    %c0 = arith.constant 0 : index
    %c0_0 = arith.constant 0 : index
    %0 = vector.load %arg1[%c0, %c0_0] : memref<8x32xbf16, #tpu.memory_space<vmem>>, vector<8x32xbf16>
    %c0_1 = arith.constant 0 : index
    %c0_2 = arith.constant 0 : index
    %1 = vector.load %arg2[%c0_1, %c0_2] : memref<32x64xbf16, #tpu.memory_space<vmem>>, vector<32x64xbf16>
    %cst = arith.constant dense<0.000000e+00> : vector<8x64xf32>
    %2 = tpu.matmul %0, %1, %cst {dimension_numbers = #tpu.dot_dimension_numbers<[1], [0], [0], [1], [0, 0, 1, 1], [], []>} : vector<8x32xbf16>, vector<32x64xbf16>, vector<8x64xf32> -> vector<8x64xf32>
    %c0_3 = arith.constant 0 : index
    %c0_4 = arith.constant 0 : index
    %3 = vector.load %arg3[%c0_3, %c0_4] : memref<1x64xf32, #tpu.memory_space<vmem>>, vector<1x64xf32>
    %4 = vector.broadcast %3 : vector<1x64xf32> to vector<8x64xf32>
    %5 = arith.addf %2, %4 : vector<8x64xf32>
    %6 = math.tanh %5 : vector<8x64xf32>
    %7 = arith.truncf %6 : vector<8x64xf32> to vector<8x64xbf16>
    %c0_5 = arith.constant 0 : index
    %c0_6 = arith.constant 0 : index
    %8 = vector.load %arg4[%c0_5, %c0_6] : memref<64x16xbf16, #tpu.memory_space<vmem>>, vector<64x16xbf16>
    %cst_7 = arith.constant dense<0.000000e+00> : vector<8x16xf32>
    %9 = tpu.matmul %7, %8, %cst_7 {dimension_numbers = #tpu.dot_dimension_numbers<[1], [0], [0], [1], [0, 0, 1, 1], [], []>} : vector<8x64xbf16>, vector<64x16xbf16>, vector<8x16xf32> -> vector<8x16xf32>
    %c0_8 = arith.constant 0 : index
    %c0_9 = arith.constant 0 : index
    %10 = vector.load %arg5[%c0_8, %c0_9] : memref<1x16xf32, #tpu.memory_space<vmem>>, vector<1x16xf32>
    %11 = vector.broadcast %10 : vector<1x16xf32> to vector<8x16xf32>
    %12 = arith.addf %9, %11 : vector<8x16xf32>
    %c0_10 = arith.constant 0 : index
    %c0_11 = arith.constant 0 : index
    %13 = vector.load %arg6[%c0_10, %c0_11] : memref<8x16xf32, #tpu.memory_space<vmem>>, vector<8x16xf32>
    tpu.vector_store %arg6[%c0_10, %c0_11], %12 {strides = array<i32>} : memref<8x16xf32, #tpu.memory_space<vmem>>, vector<8x16xf32>,
    return
  }
  func.func @transform_0(%arg0: i32) -> (i32, i32) {
    %c0_i32 = arith.constant 0 : i32
    %c0_i32_0 = arith.constant 0 : i32
    return %arg0, %c0_i32 : i32, i32
  }
  func.func @transform_1(%arg0: i32) -> (i32, i32) {
    %c0_i32 = arith.constant 0 : i32
    %c0_i32_0 = arith.constant 0 : i32
    %c0_i32_1 = arith.constant 0 : i32
    return %c0_i32, %c0_i32_0 : i32, i32
  }
  func.func @transform_2(%arg0: i32) -> (i32, i32) {
    %c0_i32 = arith.constant 0 : i32
    %c0_i32_0 = arith.constant 0 : i32
    %c0_i32_1 = arith.constant 0 : i32
    return %c0_i32, %c0_i32_0 : i32, i32
  }
  func.func @transform_3(%arg0: i32) -> (i32, i32) {
    %c0_i32 = arith.constant 0 : i32
    %c0_i32_0 = arith.constant 0 : i32
    %c0_i32_1 = arith.constant 0 : i32
    return %c0_i32, %c0_i32_0 : i32, i32
  }
  func.func @transform_4(%arg0: i32) -> (i32, i32) {
    %c0_i32 = arith.constant 0 : i32
    %c0_i32_0 = arith.constant 0 : i32
    %c0_i32_1 = arith.constant 0 : i32
    return %c0_i32, %c0_i32_0 : i32, i32
  }
  func.func @transform_5(%arg0: i32) -> (i32, i32) {
    %c0_i32 = arith.constant 0 : i32
    %c0_i32_0 = arith.constant 0 : i32
    return %arg0, %c0_i32 : i32, i32
  }
}

</mosaic_0001>

<llo_original>
// kernel: tpu_custom_call.1
$region0: #{tpu_custom_call.1}
  #allocation0 [shape = 'u32[]', space=smem, size = 0x4, offset = 0x4, fixed_abs, tag = 'smem constant byte address 0x4 - core index']
  #allocation1 [shape = 'u32[72,128]{1,0:T(1,128)}', space=vmem, size = 0x9000, scoped, tag = 'internal scratch']
  %s0 = inlined_call_operand.vmem [shape: bf16[16,32], index: 0, kind: input, shape index: {}]
  %s1 = inlined_call_operand.vmem [shape: bf16[32,64], index: 1, kind: input, shape index: {}]
  %s2 = inlined_call_operand.vmem [shape: f32[1,64], index: 2, kind: input, shape index: {}]
  %s3 = inlined_call_operand.vmem [shape: bf16[64,16], index: 3, kind: input, shape index: {}]
  %s4 = inlined_call_operand.vmem [shape: f32[1,16], index: 4, kind: input, shape index: {}]
  %s5 = inlined_call_operand.hbm [shape: f32[16,16], index: 5, kind: output, shape index: {}]
  %s6 = sld [smem:[#allocation0]]
  $region53: #{tpu_custom_call.1} parent=0
    _
  %s8 = ssub.s32 1, %s6
  %s9 = scalar_select 0, %s8, %s6
  $region1: #{tpu_custom_call.1} parent=0
    #allocation2 [shape = 'u8[8192]{0}', space=vmem, size = 0x2000, scoped, tag = 'output window, operand 0']
    #allocation3 [shape = 's32[2]{0}', space=sflag, size = 0x8, scoped, tag = 'scoped memory for tpu_custom_call.1']
    %10 = vsyncpa [#allocation3], 0
    %s11 = scalar_lea.sflag [#allocation3], 1
    %12 = vsyncpa %s11, 0
    loop: start=0, step=1, limit=4
    $region2: #{tpu_custom_call.1} parent=1 // loop_pre_header
      _
    $region3: #{tpu_custom_call.1} parent=1 // loop_header
      %s14 = sphi 0, %s18
      %p15 = scmp.ge.s32.totalorder %s14, 4
      %s24 = sphi 0, %s26
      %s27 = sphi 0, %s24
      %s28 = sphi 0, %s27
      %s44 = sphi 0, %s28
      %s48 = sphi 0, %s48
      %s50 = sphi 0, %s48
      %s51 = sphi 0, %s50
      %s65 = sphi 0, %s51
      %s69 = sphi 0, %s69
      %s71 = sphi 0, %s69
      %s72 = sphi 0, %s71
      %s86 = sphi 0, %s72
      %s90 = sphi 0, %s90
      %s92 = sphi 0, %s90
      %s93 = sphi 0, %s92
      %s107 = sphi 0, %s93
      %s111 = sphi 0, %s111
      %s113 = sphi 0, %s111
      %s114 = sphi 0, %s113
      %s128 = sphi 0, %s114
      %s134 = sphi 0, %s136
      %s137 = sphi 0, %s134
      %s138 = sphi 0, %s137
      %s154 = sphi 0, %s138
    $region4: #{tpu_custom_call.1} parent=1 // loop_header_branch
      %17 = sbr.rel (%p15) target = $region8
    $region5: #{tpu_custom_call.1} parent=1 // loop_body
      %s19 = ssub.s32 %s14, 1
      %s20 = ssub.s32 %s14, 2
      %s21 = sadd.s32 %s14, 1
      %s22 = ssub.s32 %s14, %s21
      %p23 = scmp.eq.s32.totalorder %s22, 0
      %s25 = sadd.s32 %s24, 1
      %s26 = scalar_select %p23, %s24, %s25
      %p29 = pneg %p23
      %p30 = scmp.eq.s32.totalorder %s14, 1
      %p31 = por %p29, %p30
      %p32 = scmp.ne.s32.totalorder %s24, %s27
      %p33 = scmp.eq.s32.totalorder %s14, 0
      %p34 = por %p32, %p33
      %p35 = scmp.ne.s32.totalorder %s24, %s27
      %p36 = scmp.eq.s32.totalorder %s19, 1
      %p37 = por %p35, %p36
      %p38 = scmp.ne.s32.totalorder %s27, %s28
      %p39 = scmp.eq.s32.totalorder %s19, 0
      %p40 = por %p38, %p39
      %p41 = scmp.ne.s32.totalorder %s27, %s28
      %p42 = scmp.eq.s32.totalorder %s20, 1
      %p43 = por %p41, %p42
      %p45 = scmp.ne.s32.totalorder %s28, %s44
      %p46 = scmp.eq.s32.totalorder %s20, 0
      %p47 = por %p45, %p46
      %s49 = sadd.s32 %s48, 1
      %p52 = scmp.eq.s32.totalorder %s14, 1
      %p53 = scmp.ne.s32.totalorder %s48, %s50
      %p54 = scmp.eq.s32.totalorder %s14, 0
      %p55 = por %p53, %p54
      %p56 = scmp.ne.s32.totalorder %s48, %s50
      %p57 = scmp.eq.s32.totalorder %s19, 1
      %p58 = por %p56, %p57
      %p59 = scmp.ne.s32.totalorder %s50, %s51
      %p60 = scmp.eq.s32.totalorder %s19, 0
      %p61 = por %p59, %p60
      %p62 = scmp.ne.s32.totalorder %s50, %s51
      %p63 = scmp.eq.s32.totalorder %s20, 1
      %p64 = por %p62, %p63
      %p66 = scmp.ne.s32.totalorder %s51, %s65
      %p67 = scmp.eq.s32.totalorder %s20, 0
      %p68 = por %p66, %p67
      %s70 = sadd.s32 %s69, 1
      %p73 = scmp.eq.s32.totalorder %s14, 1
      %p74 = scmp.ne.s32.totalorder %s69, %s71
      %p75 = scmp.eq.s32.totalorder %s14, 0
      %p76 = por %p74, %p75
      %p77 = scmp.ne.s32.totalorder %s69, %s71
      %p78 = scmp.eq.s32.totalorder %s19, 1
      %p79 = por %p77, %p78
      %p80 = scmp.ne.s32.totalorder %s71, %s72
      %p81 = scmp.eq.s32.totalorder %s19, 0
      %p82 = por %p80, %p81
      %p83 = scmp.ne.s32.totalorder %s71, %s72
      %p84 = scmp.eq.s32.totalorder %s20, 1
      %p85 = por %p83, %p84
      %p87 = scmp.ne.s32.totalorder %s72, %s86
      %p88 = scmp.eq.s32.totalorder %s20, 0
      %p89 = por %p87, %p88
      %s91 = sadd.s32 %s90, 1
      %p94 = scmp.eq.s32.totalorder %s14, 1
      %p95 = scmp.ne.s32.totalorder %s90, %s92
      %p96 = scmp.eq.s32.totalorder %s14, 0
      %p97 = por %p95, %p96
      %p98 = scmp.ne.s32.totalorder %s90, %s92
      %p99 = scmp.eq.s32.totalorder %s19, 1
      %p100 = por %p98, %p99
      %p101 = scmp.ne.s32.totalorder %s92, %s93
      %p102 = scmp.eq.s32.totalorder %s19, 0
      %p103 = por %p101, %p102
      %p104 = scmp.ne.s32.totalorder %s92, %s93
      %p105 = scmp.eq.s32.totalorder %s20, 1
      %p106 = por %p104, %p105
      %p108 = scmp.ne.s32.totalorder %s93, %s107
      %p109 = scmp.eq.s32.totalorder %s20, 0
      %p110 = por %p108, %p109
      %s112 = sadd.s32 %s111, 1
      %p115 = scmp.eq.s32.totalorder %s14, 1
      %p116 = scmp.ne.s32.totalorder %s111, %s113
      %p117 = scmp.eq.s32.totalorder %s14, 0
      %p118 = por %p116, %p117
      %p119 = scmp.ne.s32.totalorder %s111, %s113
      %p120 = scmp.eq.s32.totalorder %s19, 1
      %p121 = por %p119, %p120
      %p122 = scmp.ne.s32.totalorder %s113, %s114
      %p123 = scmp.eq.s32.totalorder %s19, 0
      %p124 = por %p122, %p123
      %p125 = scmp.ne.s32.totalorder %s113, %s114
      %p126 = scmp.eq.s32.totalorder %s20, 1
      %p127 = por %p125, %p126
      %p129 = scmp.ne.s32.totalorder %s114, %s128
      %p130 = scmp.eq.s32.totalorder %s20, 0
      %p131 = por %p129, %p130
      %s132 = ssub.s32 %s14, %s21
      %p133 = scmp.eq.s32.totalorder %s132, 0
      %s135 = sadd.s32 %s134, 1
      %s136 = scalar_select %p133, %s134, %s135
      %p139 = pneg %p133
      %p140 = scmp.eq.s32.totalorder %s14, 1
      %p141 = por %p139, %p140
      %p142 = scmp.ne.s32.totalorder %s134, %s137
      %p143 = scmp.eq.s32.totalorder %s14, 0
      %p144 = por %p142, %p143
      %p145 = scmp.ne.s32.totalorder %s134, %s137
      %p146 = scmp.eq.s32.totalorder %s19, 1
      %p147 = por %p145, %p146
      %p148 = scmp.ne.s32.totalorder %s137, %s138
      %p149 = scmp.eq.s32.totalorder %s19, 0
      %p150 = por %p148, %p149
      %p151 = scmp.ne.s32.totalorder %s137, %s138
      %p152 = scmp.eq.s32.totalorder %s20, 1
      %p153 = por %p151, %p152
      %p155 = scmp.ne.s32.totalorder %s138, %s154
      %p156 = scmp.eq.s32.totalorder %s20, 0
      %p157 = por %p155, %p156
      %p158 = scmp.le.s32.totalorder 1, %s14
      %p159 = scmp.lt.s32.totalorder %s14, 3
      %p160 = pnand %p158, %p159
      %p161 = pneg %p160
      // Predicated region
      $region9: #{tpu_custom_call.1} parent=5 // pred_check
        _
      $region10: #{tpu_custom_call.1} parent=5 // pred_check_branch
        %163 = sbr.rel (%p160) target = $region12
      $region11: #{tpu_custom_call.1} parent=5 // pred_region
        %s164 = ssub.s32 %s14, 1
        // Predicated region
        $region13: #{tpu_custom_call.1} parent=11 // pred_check
          %p165 = pneg %p61
        $region14: #{tpu_custom_call.1} parent=11 // pred_check_branch
          %167 = sbr.rel (%p165) target = $region16
        $region15: #{tpu_custom_call.1} parent=11 // pred_region
          _
        $region16: #{tpu_custom_call.1} parent=11 // pred_fallthru
          _
        // Predicated region
        $region17: #{tpu_custom_call.1} parent=11 // pred_check
          %p168 = pneg %p82
        $region18: #{tpu_custom_call.1} parent=11 // pred_check_branch
          %170 = sbr.rel (%p168) target = $region20
        $region19: #{tpu_custom_call.1} parent=11 // pred_region
          _
        $region20: #{tpu_custom_call.1} parent=11 // pred_fallthru
          _
        // Predicated region
        $region21: #{tpu_custom_call.1} parent=11 // pred_check
          %p171 = pneg %p103
        $region22: #{tpu_custom_call.1} parent=11 // pred_check_branch
          %173 = sbr.rel (%p171) target = $region24
        $region23: #{tpu_custom_call.1} parent=11 // pred_region
          _
        $region24: #{tpu_custom_call.1} parent=11 // pred_fallthru
          _
        // Predicated region
        $region25: #{tpu_custom_call.1} parent=11 // pred_check
          %p174 = pneg %p124
        $region26: #{tpu_custom_call.1} parent=11 // pred_check_branch
          %176 = sbr.rel (%p174) target = $region28
        $region27: #{tpu_custom_call.1} parent=11 // pred_region
          _
        $region28: #{tpu_custom_call.1} parent=11 // pred_fallthru
          _
      $region12: #{tpu_custom_call.1} parent=5 // pred_fallthru
        _
      %p177 = scmp.lt.s32.totalorder %s14, 2
      // Predicated region
      $region29: #{tpu_custom_call.1} parent=5 // pred_check
        %p178 = pneg %p177
      $region30: #{tpu_custom_call.1} parent=5 // pred_check_branch
        %180 = sbr.rel (%p178) target = $region32
      $region31: #{tpu_custom_call.1} parent=5 // pred_region
        // Predicated region
        $region33: #{tpu_custom_call.1} parent=31 // pred_check
          %p181 = pneg %p34
        $region34: #{tpu_custom_call.1} parent=31 // pred_check_branch
          %183 = sbr.rel (%p181) target = $region36
        $region35: #{tpu_custom_call.1} parent=31 // pred_region
          %p184 = scmp.lt.s32.totalorder %s14, 1
          %s185 = scalar_select %p184, %s14, 1
          %s186 = smul.addr %s185, 4
          %s187 = scalar_lea.vmem %s0, %s186
        $region36: #{tpu_custom_call.1} parent=31 // pred_fallthru
          _
      $region32: #{tpu_custom_call.1} parent=5 // pred_fallthru
        _
      %p188 = scmp.le.s32.totalorder 1, %s14
      %p189 = scmp.lt.s32.totalorder %s14, 3
      %p190 = pnand %p188, %p189
      %p191 = pneg %p190
      // Predicated region
      $region37: #{tpu_custom_call.1} parent=5 // pred_check
        _
      $region38: #{tpu_custom_call.1} parent=5 // pred_check_branch
        %193 = sbr.rel (%p190) target = $region40
      $region39: #{tpu_custom_call.1} parent=5 // pred_region
        %s194 = ssub.s32 %s14, 1
        %p195 = scmp.lt.s32.totalorder %s19, 1
        %s196 = scalar_select %p195, %s19, 1
        %s197 = smul.addr %s196, 4
        %s198 = scalar_lea.vmem %s0, %s197
        %p199 = pneg %p40
        %p200 = pneg %p37
        %p201 = pneg %p61
        %p202 = pneg %p58
        %p203 = pneg %p82
        %p204 = pneg %p79
        %p205 = pneg %p103
        %p206 = pneg %p100
        %p207 = pneg %p124
        %p208 = pneg %p121
        %p209 = pneg %p150
        %p210 = pneg %p147
        %s211 = sand.u32 %s137, 1
        %s212 = scalar_lea.sflag [#allocation3], %s211
        %s213 = sand.u32 %s137, 1
        %s214 = smul.addr %s213, 8
        %s215 = scalar_lea.vmem [#allocation2], %s214
        %p216 = scmp.lt.s32.totalorder %s19, 1
        %s217 = scalar_select %p216, %s19, 1
        %s218 = smul.addr %s217, 4
        %s219 = scalar_lea.vmem %s0, %s218
        %v221 = vld [vmem:[%s219] sm:$0xf]
        %v222 = vld [vmem:[%s1] sm:$0xf]
        %v223 = vld [vmem:[%s1 + $0x4] sm:$0xf]
        %v224 = vld [vmem:[%s1 + $0x8] sm:$0xf]
        %v225 = vld [vmem:[%s1 + $0xc] sm:$0xf]
        %v226 = vld [vmem:[%s2] sm:$0x1]
        %v228 = vperm.slane %v226, 0
        %v234 = vunpack.c.l.b16 %v222
        %v235 = vunpack.c.l.b16 %v223
        %v236 = vunpack.c.l.b16 %v224
        %v237 = vunpack.c.l.b16 %v225
        %v238 = vpack.c.b16 %v235, %v234
        %v239 = vpack.c.b16 %v237, %v236
        %vm242 = vcmask 261120
        %v244 = vsel %vm242, %v221, 0
        %246 = vmatpush.bf16.msra.mxu0 0
        %247 = vmatpush.bf16.msra.mxu0 0
        %248 = vmatpush.bf16.msra.mxu0 0
        %249 = vmatpush.bf16.msra.mxu0 0
        %250 = vmatpush.bf16.msra.mxu0 0
        %251 = vmatpush.bf16.msra.mxu0 0
        %252 = vmatpush.bf16.msra.mxu0 %v239
        %253 = vmatpush.bf16.msra.mxu0 %v238
        %254 = vmatmul.bf16.gmra.mxu0 %v244
        %v255 = vpop.f32.mrf.mxu0
        %v256 = vadd.f32 %v228, %v255
        %v257 = vpop.f32.mrf.mxu0
        %258 = vdwg.mxu0
        %v259 = vtanh.pop %v256
        %v260 = vpack.c.bf16 %v259, %v259
        %v261 = vld [vmem:[%s3] sm:$0xf]
        %v262 = vld [vmem:[%s3 + $0x4] sm:$0xf]
        %v263 = vld [vmem:[%s3 + $0x8] sm:$0xf]
        %v264 = vld [vmem:[%s3 + $0xc] sm:$0xf]
        %v265 = vld [vmem:[%s3 + $0x10] sm:$0xf]
        %v266 = vld [vmem:[%s3 + $0x14] sm:$0xf]
        %v267 = vld [vmem:[%s3 + $0x18] sm:$0xf]
        %v268 = vld [vmem:[%s3 + $0x1c] sm:$0xf]
        %v269 = vld [vmem:[%s4] sm:$0x1]
        %v271 = vperm.slane %v269, 0
        %v281 = vunpack.c.l.b16 %v261
        %v282 = vunpack.c.l.b16 %v262
        %v283 = vunpack.c.l.b16 %v263
        %v284 = vunpack.c.l.b16 %v264
        %v285 = vunpack.c.l.b16 %v265
        %v286 = vunpack.c.l.b16 %v266
        %v287 = vunpack.c.l.b16 %v267
        %v288 = vunpack.c.l.b16 %v268
        %v289 = vpack.c.b16 %v282, %v281
        %v290 = vpack.c.b16 %v284, %v283
        %v291 = vpack.c.b16 %v286, %v285
        %v292 = vpack.c.b16 %v288, %v287
        %vm297 = vcmask 523264
        %v299 = vsel %vm297, %v260, 0
        %301 = vmatpush.bf16.msra.mxu0 0
        %302 = vmatpush.bf16.msra.mxu0 0
        %303 = vmatpush.bf16.msra.mxu0 0
        %304 = vmatpush.bf16.msra.mxu0 0
        %305 = vmatpush.bf16.msra.mxu0 %v292
        %306 = vmatpush.bf16.msra.mxu0 %v291
        %307 = vmatpush.bf16.msra.mxu0 %v290
        %308 = vmatpush.bf16.msra.mxu0 %v289
        %309 = vmatmul.bf16.gmra.mxu0 %v299
        %v310 = vpop.f32.mrf.mxu0
        %v311 = vadd.f32 %v271, %v310
        %v312 = vpop.f32.mrf.mxu0
        %313 = vdwg.mxu0
        %vm314 = vcmask 130048
        %315 = vst.msk [vmem:[%s215] sm:$0xff] %vm314, %v311
        %s316 = sand.u32 %s137, 1
        %s317 = scalar_lea.sflag [#allocation3], %s316
        %s318 = sand.u32 %s137, 1
        %s319 = smul.addr %s318, 8
        %s320 = scalar_lea.vmem [#allocation2], %s319
        // Predicated region
        $region41: #{tpu_custom_call.1} parent=39 // pred_check
          %p321 = pneg %p147
        $region42: #{tpu_custom_call.1} parent=39 // pred_check_branch
          %323 = sbr.rel (%p321) target = $region44
        $region43: #{tpu_custom_call.1} parent=39 // pred_region
          %325 = vsyncadd %s317, 0
          %s326 = smul.addr %s19, 8
          %s327 = scalar_lea.hbm %s5, %s326
          %s329 = sshll.u32 %s320, 4
          %s330 = int_to_ptr.vmem [resolvable:$true] %s329
          %s331 = sshll.u32 %s327, 4
          %s332 = int_to_ptr.hbm [resolvable:$true] %s331
          %334 = dma.vmem_to_hbm [thread:$0]  %s330, 128, %s332, %s317
        $region44: #{tpu_custom_call.1} parent=39 // pred_fallthru
          _
      $region40: #{tpu_custom_call.1} parent=5 // pred_fallthru
        _
      %p335 = scmp.le.s32.totalorder 2, %s14
      // Predicated region
      $region45: #{tpu_custom_call.1} parent=5 // pred_check
        %p336 = pneg %p335
      $region46: #{tpu_custom_call.1} parent=5 // pred_check_branch
        %338 = sbr.rel (%p336) target = $region48
      $region47: #{tpu_custom_call.1} parent=5 // pred_region
        %s339 = ssub.s32 %s14, 2
        // Predicated region
        $region49: #{tpu_custom_call.1} parent=47 // pred_check
          %p340 = pneg %p153
        $region50: #{tpu_custom_call.1} parent=47 // pred_check_branch
          %342 = sbr.rel (%p340) target = $region52
        $region51: #{tpu_custom_call.1} parent=47 // pred_region
          %s343 = sand.u32 %s138, 1
          %s344 = scalar_lea.sflag [#allocation3], %s343
          %s345 = sand.u32 %s138, 1
          %s346 = smul.addr %s345, 8
          %s347 = scalar_lea.vmem [#allocation2], %s346
          %349 = dma.done %s344, 128
        $region52: #{tpu_custom_call.1} parent=47 // pred_fallthru
          _
      $region48: #{tpu_custom_call.1} parent=5 // pred_fallthru
        _
    $region6: #{tpu_custom_call.1} parent=1 // loop_footer
      %s18 = sadd.s32 1, %s14
    $region7: #{tpu_custom_call.1} parent=1 // loop_footer_branch
      %13 = sbr.rel target = $region3
    $region8: #{tpu_custom_call.1} parent=1 // loop_exit
      _
    %350 = vsyncpa [#allocation3], 1
    %s351 = scalar_lea.sflag [#allocation3], 1
    %352 = vsyncpa %s351, 1

// kernel: tpu_custom_call.1
$region0: #{tpu_custom_call.1}
  #allocation0 [shape = 'u32[]', space=smem, size = 0x4, offset = 0x4, fixed_abs, tag = 'smem constant byte address 0x4 - core index']
  #allocation1 [shape = 'u32[72,128]{1,0:T(1,128)}', space=vmem, size = 0x9000, scoped, tag = 'internal scratch']
  %s0 = inlined_call_operand.vmem [shape: bf16[16,32], index: 0, kind: input, shape index: {}]
  %s1 = inlined_call_operand.vmem [shape: bf16[32,64], index: 1, kind: input, shape index: {}]
  %s2 = inlined_call_operand.vmem [shape: f32[1,64], index: 2, kind: input, shape index: {}]
  %s3 = inlined_call_operand.vmem [shape: bf16[64,16], index: 3, kind: input, shape index: {}]
  %s4 = inlined_call_operand.vmem [shape: f32[1,16], index: 4, kind: input, shape index: {}]
  %s5 = inlined_call_operand.hbm [shape: f32[16,16], index: 5, kind: output, shape index: {}]
  %s6 = sld [smem:[#allocation0]]
  $region53: #{tpu_custom_call.1} parent=0
    _
  %s8 = ssub.s32 1, %s6
  %s9 = scalar_select 0, %s8, %s6
  $region1: #{tpu_custom_call.1} parent=0
    #allocation2 [shape = 'u8[8192]{0}', space=vmem, size = 0x2000, scoped, tag = 'output window, operand 0']
    #allocation3 [shape = 's32[2]{0}', space=sflag, size = 0x8, scoped, tag = 'scoped memory for tpu_custom_call.1']
    %10 = vsyncpa [#allocation3], 0
    %s11 = scalar_lea.sflag [#allocation3], 1
    %12 = vsyncpa %s11, 0
    loop: start=0, step=1, limit=4
    $region2: #{tpu_custom_call.1} parent=1 // loop_pre_header
      _
    $region3: #{tpu_custom_call.1} parent=1 // loop_header
      %s14 = sphi 0, %s18
      %p15 = scmp.ge.s32.totalorder %s14, 4
      %s24 = sphi 0, %s26
      %s27 = sphi 0, %s24
      %s28 = sphi 0, %s27
      %s44 = sphi 0, %s28
      %s48 = sphi 0, %s48
      %s50 = sphi 0, %s48
      %s51 = sphi 0, %s50
      %s65 = sphi 0, %s51
      %s69 = sphi 0, %s69
      %s71 = sphi 0, %s69
      %s72 = sphi 0, %s71
      %s86 = sphi 0, %s72
      %s90 = sphi 0, %s90
      %s92 = sphi 0, %s90
      %s93 = sphi 0, %s92
      %s107 = sphi 0, %s93
      %s111 = sphi 0, %s111
      %s113 = sphi 0, %s111
      %s114 = sphi 0, %s113
      %s128 = sphi 0, %s114
      %s134 = sphi 0, %s136
      %s137 = sphi 0, %s134
      %s138 = sphi 0, %s137
      %s154 = sphi 0, %s138
    $region4: #{tpu_custom_call.1} parent=1 // loop_header_branch
      %17 = sbr.rel (%p15) target = $region8
    $region5: #{tpu_custom_call.1} parent=1 // loop_body
      %s19 = ssub.s32 %s14, 1
      %s20 = ssub.s32 %s14, 2
      %s21 = sadd.s32 %s14, 1
      %s22 = ssub.s32 %s14, %s21
      %p23 = scmp.eq.s32.totalorder %s22, 0
      %s25 = sadd.s32 %s24, 1
      %s26 = scalar_select %p23, %s24, %s25
      %p29 = pneg %p23
      %p30 = scmp.eq.s32.totalorder %s14, 1
      %p31 = por %p29, %p30
      %p32 = scmp.ne.s32.totalorder %s24, %s27
      %p33 = scmp.eq.s32.totalorder %s14, 0
      %p34 = por %p32, %p33
      %p35 = scmp.ne.s32.totalorder %s24, %s27
      %p36 = scmp.eq.s32.totalorder %s19, 1
      %p37 = por %p35, %p36
      %p38 = scmp.ne.s32.totalorder %s27, %s28
      %p39 = scmp.eq.s32.totalorder %s19, 0
      %p40 = por %p38, %p39
      %p41 = scmp.ne.s32.totalorder %s27, %s28
      %p42 = scmp.eq.s32.totalorder %s20, 1
      %p43 = por %p41, %p42
      %p45 = scmp.ne.s32.totalorder %s28, %s44
      %p46 = scmp.eq.s32.totalorder %s20, 0
      %p47 = por %p45, %p46
      %s49 = sadd.s32 %s48, 1
      %p52 = scmp.eq.s32.totalorder %s14, 1
      %p53 = scmp.ne.s32.totalorder %s48, %s50
      %p54 = scmp.eq.s32.totalorder %s14, 0
      %p55 = por %p53, %p54
      %p56 = scmp.ne.s32.totalorder %s48, %s50
      %p57 = scmp.eq.s32.totalorder %s19, 1
      %p58 = por %p56, %p57
      %p59 = scmp.ne.s32.totalorder %s50, %s51
      %p60 = scmp.eq.s32.totalorder %s19, 0
      %p61 = por %p59, %p60
      %p62 = scmp.ne.s32.totalorder %s50, %s51
      %p63 = scmp.eq.s32.totalorder %s20, 1
      %p64 = por %p62, %p63
      %p66 = scmp.ne.s32.totalorder %s51, %s65
      %p67 = scmp.eq.s32.totalorder %s20, 0
      %p68 = por %p66, %p67
      %s70 = sadd.s32 %s69, 1
      %p73 = scmp.eq.s32.totalorder %s14, 1
      %p74 = scmp.ne.s32.totalorder %s69, %s71
      %p75 = scmp.eq.s32.totalorder %s14, 0
      %p76 = por %p74, %p75
      %p77 = scmp.ne.s32.totalorder %s69, %s71
      %p78 = scmp.eq.s32.totalorder %s19, 1
      %p79 = por %p77, %p78
      %p80 = scmp.ne.s32.totalorder %s71, %s72
      %p81 = scmp.eq.s32.totalorder %s19, 0
      %p82 = por %p80, %p81
      %p83 = scmp.ne.s32.totalorder %s71, %s72
      %p84 = scmp.eq.s32.totalorder %s20, 1
      %p85 = por %p83, %p84
      %p87 = scmp.ne.s32.totalorder %s72, %s86
      %p88 = scmp.eq.s32.totalorder %s20, 0
      %p89 = por %p87, %p88
      %s91 = sadd.s32 %s90, 1
      %p94 = scmp.eq.s32.totalorder %s14, 1
      %p95 = scmp.ne.s32.totalorder %s90, %s92
      %p96 = scmp.eq.s32.totalorder %s14, 0
      %p97 = por %p95, %p96
      %p98 = scmp.ne.s32.totalorder %s90, %s92
      %p99 = scmp.eq.s32.totalorder %s19, 1
      %p100 = por %p98, %p99
      %p101 = scmp.ne.s32.totalorder %s92, %s93
      %p102 = scmp.eq.s32.totalorder %s19, 0
      %p103 = por %p101, %p102
      %p104 = scmp.ne.s32.totalorder %s92, %s93
      %p105 = scmp.eq.s32.totalorder %s20, 1
      %p106 = por %p104, %p105
      %p108 = scmp.ne.s32.totalorder %s93, %s107
      %p109 = scmp.eq.s32.totalorder %s20, 0
      %p110 = por %p108, %p109
      %s112 = sadd.s32 %s111, 1
      %p115 = scmp.eq.s32.totalorder %s14, 1
      %p116 = scmp.ne.s32.totalorder %s111, %s113
      %p117 = scmp.eq.s32.totalorder %s14, 0
      %p118 = por %p116, %p117
      %p119 = scmp.ne.s32.totalorder %s111, %s113
      %p120 = scmp.eq.s32.totalorder %s19, 1
      %p121 = por %p119, %p120
      %p122 = scmp.ne.s32.totalorder %s113, %s114
      %p123 = scmp.eq.s32.totalorder %s19, 0
      %p124 = por %p122, %p123
      %p125 = scmp.ne.s32.totalorder %s113, %s114
      %p126 = scmp.eq.s32.totalorder %s20, 1
      %p127 = por %p125, %p126
      %p129 = scmp.ne.s32.totalorder %s114, %s128
      %p130 = scmp.eq.s32.totalorder %s20, 0
      %p131 = por %p129, %p130
      %s132 = ssub.s32 %s14, %s21
      %p133 = scmp.eq.s32.totalorder %s132, 0
      %s135 = sadd.s32 %s134, 1
      %s136 = scalar_select %p133, %s134, %s135
      %p139 = pneg %p133
      %p140 = scmp.eq.s32.totalorder %s14, 1
      %p141 = por %p139, %p140
      %p142 = scmp.ne.s32.totalorder %s134, %s137
      %p143 = scmp.eq.s32.totalorder %s14, 0
      %p144 = por %p142, %p143
      %p145 = scmp.ne.s32.totalorder %s134, %s137
      %p146 = scmp.eq.s32.totalorder %s19, 1
      %p147 = por %p145, %p146
      %p148 = scmp.ne.s32.totalorder %s137, %s138
      %p149 = scmp.eq.s32.totalorder %s19, 0
      %p150 = por %p148, %p149
      %p151 = scmp.ne.s32.totalorder %s137, %s138
      %p152 = scmp.eq.s32.totalorder %s20, 1
      %p153 = por %p151, %p152
      %p155 = scmp.ne.s32.totalorder %s138, %s154
      %p156 = scmp.eq.s32.totalorder %s20, 0
      %p157 = por %p155, %p156
      %p158 = scmp.le.s32.totalorder 1, %s14
      %p159 = scmp.lt.s32.totalorder %s14, 3
      %p160 = pnand %p158, %p159
      %p161 = pneg %p160
      // Predicated region
      $region9: #{tpu_custom_call.1} parent=5 // pred_check
        _
      $region10: #{tpu_custom_call.1} parent=5 // pred_check_branch
        %163 = sbr.rel (%p160) target = $region12
      $region11: #{tpu_custom_call.1} parent=5 // pred_region
        %s164 = ssub.s32 %s14, 1
        // Predicated region
        $region13: #{tpu_custom_call.1} parent=11 // pred_check
          %p165 = pneg %p61
        $region14: #{tpu_custom_call.1} parent=11 // pred_check_branch
          %167 = sbr.rel (%p165) target = $region16
        $region15: #{tpu_custom_call.1} parent=11 // pred_region
          _
        $region16: #{tpu_custom_call.1} parent=11 // pred_fallthru
          _
        // Predicated region
        $region17: #{tpu_custom_call.1} parent=11 // pred_check
          %p168 = pneg %p82
        $region18: #{tpu_custom_call.1} parent=11 // pred_check_branch
          %170 = sbr.rel (%p168) target = $region20
        $region19: #{tpu_custom_call.1} parent=11 // pred_region
          _
        $region20: #{tpu_custom_call.1} parent=11 // pred_fallthru
          _
        // Predicated region
        $region21: #{tpu_custom_call.1} parent=11 // pred_check
          %p171 = pneg %p103
        $region22: #{tpu_custom_call.1} parent=11 // pred_check_branch
          %173 = sbr.rel (%p171) target = $region24
        $region23: #{tpu_custom_call.1} parent=11 // pred_region
          _
        $region24: #{tpu_custom_call.1} parent=11 // pred_fallthru
          _
        // Predicated region
        $region25: #{tpu_custom_call.1} parent=11 // pred_check
          %p174 = pneg %p124
        $region26: #{tpu_custom_call.1} parent=11 // pred_check_branch
          %176 = sbr.rel (%p174) target = $region28
        $region27: #{tpu_custom_call.1} parent=11 // pred_region
          _
        $region28: #{tpu_custom_call.1} parent=11 // pred_fallthru
          _
      $region12: #{tpu_custom_call.1} parent=5 // pred_fallthru
        _
      %p177 = scmp.lt.s32.totalorder %s14, 2
      // Predicated region
      $region29: #{tpu_custom_call.1} parent=5 // pred_check
        %p178 = pneg %p177
      $region30: #{tpu_custom_call.1} parent=5 // pred_check_branch
        %180 = sbr.rel (%p178) target = $region32
      $region31: #{tpu_custom_call.1} parent=5 // pred_region
        // Predicated region
        $region33: #{tpu_custom_call.1} parent=31 // pred_check
          %p181 = pneg %p34
        $region34: #{tpu_custom_call.1} parent=31 // pred_check_branch
          %183 = sbr.rel (%p181) target = $region36
        $region35: #{tpu_custom_call.1} parent=31 // pred_region
          %p184 = scmp.lt.s32.totalorder %s14, 1
          %s185 = scalar_select %p184, %s14, 1
          %s186 = smul.addr %s185, 4
          %s187 = scalar_lea.vmem %s0, %s186
        $region36: #{tpu_custom_call.1} parent=31 // pred_fallthru
          _
      $region32: #{tpu_custom_call.1} parent=5 // pred_fallthru
        _
      %p188 = scmp.le.s32.totalorder 1, %s14
      %p189 = scmp.lt.s32.totalorder %s14, 3
      %p190 = pnand %p188, %p189
      %p191 = pneg %p190
      // Predicated region
      $region37: #{tpu_custom_call.1} parent=5 // pred_check
        _
      $region38: #{tpu_custom_call.1} parent=5 // pred_check_branch
        %193 = sbr.rel (%p190) target = $region40
      $region39: #{tpu_custom_call.1} parent=5 // pred_region
        %s194 = ssub.s32 %s14, 1
        %p195 = scmp.lt.s32.totalorder %s19, 1
        %s196 = scalar_select %p195, %s19, 1
        %s197 = smul.addr %s196, 4
        %s198 = scalar_lea.vmem %s0, %s197
        %p199 = pneg %p40
        %p200 = pneg %p37
        %p201 = pneg %p61
        %p202 = pneg %p58
        %p203 = pneg %p82
        %p204 = pneg %p79
        %p205 = pneg %p103
        %p206 = pneg %p100
        %p207 = pneg %p124
        %p208 = pneg %p121
        %p209 = pneg %p150
        %p210 = pneg %p147
        %s211 = sand.u32 %s137, 1
        %s212 = scalar_lea.sflag [#allocation3], %s211
        %s213 = sand.u32 %s137, 1
        %s214 = smul.addr %s213, 8
        %s215 = scalar_lea.vmem [#allocation2], %s214
        %p216 = scmp.lt.s32.totalorder %s19, 1
        %s217 = scalar_select %p216, %s19, 1
        %s218 = smul.addr %s217, 4
        %s219 = scalar_lea.vmem %s0, %s218
        %v221 = vld [vmem:[%s219] sm:$0xf]
        %v222 = vld [vmem:[%s1] sm:$0xf]
        %v223 = vld [vmem:[%s1 + $0x4] sm:$0xf]
        %v224 = vld [vmem:[%s1 + $0x8] sm:$0xf]
        %v225 = vld [vmem:[%s1 + $0xc] sm:$0xf]
        %v226 = vld [vmem:[%s2] sm:$0x1]
        %v228 = vperm.slane %v226, 0
        %v234 = vunpack.c.l.b16 %v222
        %v235 = vunpack.c.l.b16 %v223
        %v236 = vunpack.c.l.b16 %v224
        %v237 = vunpack.c.l.b16 %v225
        %v238 = vpack.c.b16 %v235, %v234
        %v239 = vpack.c.b16 %v237, %v236
        %vm242 = vcmask 261120
        %v244 = vsel %vm242, %v221, 0
        %246 = vmatpush.bf16.msra.mxu0 0
        %247 = vmatpush.bf16.msra.mxu0 0
        %248 = vmatpush.bf16.msra.mxu0 0
        %249 = vmatpush.bf16.msra.mxu0 0
        %250 = vmatpush.bf16.msra.mxu0 0
        %251 = vmatpush.bf16.msra.mxu0 0
        %252 = vmatpush.bf16.msra.mxu0 %v239
        %253 = vmatpush.bf16.msra.mxu0 %v238
        %254 = vmatmul.bf16.gmra.mxu0 %v244
        %v255 = vpop.f32.mrf.mxu0
        %v256 = vadd.f32 %v228, %v255
        %v257 = vpop.f32.mrf.mxu0
        %258 = vdwg.mxu0
        %v259 = vtanh.pop %v256
        %v260 = vpack.c.bf16 %v259, %v259
        %v261 = vld [vmem:[%s3] sm:$0xf]
        %v262 = vld [vmem:[%s3 + $0x4] sm:$0xf]
        %v263 = vld [vmem:[%s3 + $0x8] sm:$0xf]
        %v264 = vld [vmem:[%s3 + $0xc] sm:$0xf]
        %v265 = vld [vmem:[%s3 + $0x10] sm:$0xf]
        %v266 = vld [vmem:[%s3 + $0x14] sm:$0xf]
        %v267 = vld [vmem:[%s3 + $0x18] sm:$0xf]
        %v268 = vld [vmem:[%s3 + $0x1c] sm:$0xf]
        %v269 = vld [vmem:[%s4] sm:$0x1]
        %v271 = vperm.slane %v269, 0
        %v281 = vunpack.c.l.b16 %v261
        %v282 = vunpack.c.l.b16 %v262
        %v283 = vunpack.c.l.b16 %v263
        %v284 = vunpack.c.l.b16 %v264
        %v285 = vunpack.c.l.b16 %v265
        %v286 = vunpack.c.l.b16 %v266
        %v287 = vunpack.c.l.b16 %v267
        %v288 = vunpack.c.l.b16 %v268
        %v289 = vpack.c.b16 %v282, %v281
        %v290 = vpack.c.b16 %v284, %v283
        %v291 = vpack.c.b16 %v286, %v285
        %v292 = vpack.c.b16 %v288, %v287
        %vm297 = vcmask 523264
        %v299 = vsel %vm297, %v260, 0
        %301 = vmatpush.bf16.msra.mxu0 0
        %302 = vmatpush.bf16.msra.mxu0 0
        %303 = vmatpush.bf16.msra.mxu0 0
        %304 = vmatpush.bf16.msra.mxu0 0
        %305 = vmatpush.bf16.msra.mxu0 %v292
        %306 = vmatpush.bf16.msra.mxu0 %v291
        %307 = vmatpush.bf16.msra.mxu0 %v290
        %308 = vmatpush.bf16.msra.mxu0 %v289
        %309 = vmatmul.bf16.gmra.mxu0 %v299
        %v310 = vpop.f32.mrf.mxu0
        %v311 = vadd.f32 %v271, %v310
        %v312 = vpop.f32.mrf.mxu0
        %313 = vdwg.mxu0
        %vm314 = vcmask 130048
        %315 = vst.msk [vmem:[%s215] sm:$0xff] %vm314, %v311
        %s316 = sand.u32 %s137, 1
        %s317 = scalar_lea.sflag [#allocation3], %s316
        %s318 = sand.u32 %s137, 1
        %s319 = smul.addr %s318, 8
        %s320 = scalar_lea.vmem [#allocation2], %s319
        // Predicated region
        $region41: #{tpu_custom_call.1} parent=39 // pred_check
          %p321 = pneg %p147
        $region42: #{tpu_custom_call.1} parent=39 // pred_check_branch
          %323 = sbr.rel (%p321) target = $region44
        $region43: #{tpu_custom_call.1} parent=39 // pred_region
          %325 = vsyncadd %s317, 0
          %s326 = smul.addr %s19, 8
          %s327 = scalar_lea.hbm %s5, %s326
          %s329 = sshll.u32 %s320, 4
          %s330 = int_to_ptr.vmem [resolvable:$true] %s329
          %s331 = sshll.u32 %s327, 4
          %s332 = int_to_ptr.hbm [resolvable:$true] %s331
          %334 = dma.vmem_to_hbm [thread:$0]  %s330, 128, %s332, %s317
        $region44: #{tpu_custom_call.1} parent=39 // pred_fallthru
          _
      $region40: #{tpu_custom_call.1} parent=5 // pred_fallthru
        _
      %p335 = scmp.le.s32.totalorder 2, %s14
      // Predicated region
      $region45: #{tpu_custom_call.1} parent=5 // pred_check
        %p336 = pneg %p335
      $region46: #{tpu_custom_call.1} parent=5 // pred_check_branch
        %338 = sbr.rel (%p336) target = $region48
      $region47: #{tpu_custom_call.1} parent=5 // pred_region
        %s339 = ssub.s32 %s14, 2
        // Predicated region
        $region49: #{tpu_custom_call.1} parent=47 // pred_check
          %p340 = pneg %p153
        $region50: #{tpu_custom_call.1} parent=47 // pred_check_branch
          %342 = sbr.rel (%p340) target = $region52
        $region51: #{tpu_custom_call.1} parent=47 // pred_region
          %s343 = sand.u32 %s138, 1
          %s344 = scalar_lea.sflag [#allocation3], %s343
          %s345 = sand.u32 %s138, 1
          %s346 = smul.addr %s345, 8
          %s347 = scalar_lea.vmem [#allocation2], %s346
          %349 = dma.done %s344, 128
        $region52: #{tpu_custom_call.1} parent=47 // pred_fallthru
          _
      $region48: #{tpu_custom_call.1} parent=5 // pred_fallthru
        _
    $region6: #{tpu_custom_call.1} parent=1 // loop_footer
      %s18 = sadd.s32 1, %s14
    $region7: #{tpu_custom_call.1} parent=1 // loop_footer_branch
      %13 = sbr.rel target = $region3
    $region8: #{tpu_custom_call.1} parent=1 // loop_exit
      _
    %350 = vsyncpa [#allocation3], 1
    %s351 = scalar_lea.sflag [#allocation3], 1
    %352 = vsyncpa %s351, 1

</llo_original>
